<compile_context>
chip_gen: v7x
topology: tpu7x:2x2x1
jax: 0.10.0
libtpu: 0.0.40
codegen_flags: <defaults>
</compile_context>

<pallas_src>
import jax
import jax.numpy as jnp
import numpy as np
from jax.experimental import pallas as pl
from jax.experimental.pallas import tpu as pltpu

LANE = 128


def _round_up(x, m):
    return (x + m - 1) // m * m


# ----------------------------- Pallas kernel ------------------------------ #
def _sem_head_kernel(x_ref, w_ref, b_ref, o_ref):
    # x_ref: (tile_n, K) bf16 im2col rows   w_ref: (K, Cp) bf16 flattened weight
    # b_ref: (1, Cp)   f32 bias             o_ref: (tile_n, Cp) f32 logits
    acc = jnp.dot(x_ref[...], w_ref[...], preferred_element_type=jnp.float32)
    o_ref[...] = (acc + b_ref[...]).astype(o_ref.dtype)


def sem_head_matmul(x, w, b, *, tile_n):
    """logits = x @ w + b, tiled over rows of x (x, w bf16; accum/bias/out f32)."""
    N, K = x.shape
    K2, Cp = w.shape
    assert K == K2 and N % tile_n == 0 and Cp % LANE == 0
    grid = (N // tile_n,)
    return pl.pallas_call(
        _sem_head_kernel,
        out_shape=jax.ShapeDtypeStruct((N, Cp), jnp.float32),
        grid_spec=pltpu.PrefetchScalarGridSpec(
            num_scalar_prefetch=0,
            grid=grid,
            in_specs=[
                pl.BlockSpec((tile_n, K), lambda i: (i, 0)),  # im2col row tile
                pl.BlockSpec((K, Cp), lambda i: (0, 0)),      # full flattened conv weight
                pl.BlockSpec((1, Cp), lambda i: (0, 0)),      # bias (f32)
            ],
            out_specs=pl.BlockSpec((tile_n, Cp), lambda i: (i, 0)),
        ),
        compiler_params=pltpu.CompilerParams(
            dimension_semantics=("parallel",)),            # shard row tiles across TCs (v7x)
    )(x, w, b)


# --------------------- CylinderSemanticHead forward ----------------------- #
def cylinder_semantic_head(feats, coords, weight, bias, grid_shape, *, max_tile_n=1024):
    """
    feats:  [N, C_in] float32     active-voxel features
    coords: [N, 4]    int32       (batch, z, y, x) of each active voxel
    weight: [3, 3, 3, C_in, C_out] float32   SubMConv3d kernel
    bias:   [C_out]   float32
    grid_shape: (B, D, H, W) dense voxel grid extents
    returns: logits [N, C_out] float32
    """
    B, D, H, W = grid_shape
    N, C_in = feats.shape
    C_out = weight.shape[-1]
    K = 27 * C_in
    Cp = _round_up(C_out, LANE)          # lane-dense output channels

    # Stream the dominant operand in bf16 (f32 accumulation inside the kernel).
    feats_bf = feats.astype(jnp.bfloat16)

    # Densify with a 1-voxel zero halo (padding=1) and gather the 27 neighbors
    # of every active voxel (cross-correlation convention, matching spconv).
    # NOTE: duplicate coords would be silently dropped by the scatter; inputs
    # are assumed unique (as in a SparseConvTensor).
    dense = jnp.zeros((B, D + 2, H + 2, W + 2, C_in), jnp.bfloat16)
    dense = dense.at[coords[:, 0], coords[:, 1] + 1,
                     coords[:, 2] + 1, coords[:, 3] + 1].set(feats_bf)
    cols = []
    for dz in range(3):
        for dy in range(3):
            for dx in range(3):
                cols.append(dense[coords[:, 0],
                                  coords[:, 1] + dz,
                                  coords[:, 2] + dy,
                                  coords[:, 3] + dx])
    x = jnp.concatenate(cols, axis=1)    # [N, 27*C_in] bf16

    # Row-tile selection: as large as possible (<= max_tile_n) to amortize
    # per-grid-step overhead, but keep >= 2 grid steps when N allows so both
    # v7x TensorCores are used.
    n128 = _round_up(N, LANE)
    tile_n = min(max_tile_n, n128)
    if n128 >= 2 * LANE and n128 // tile_n < 2:
        tile_n = _round_up(n128 // 2, LANE)
    n_pad = _round_up(N, tile_n)
    x_pad = jnp.pad(x, ((0, n_pad - N), (0, 0)))

    # Flatten conv weight to (dz,dy,dx,C_in) x C_out; pad only the output
    # channel dim to a lane multiple (do NOT pad K); cast to bf16.
    w2d = weight.reshape(K, C_out)
    w2d = jnp.pad(w2d, ((0, 0), (0, Cp - C_out))).astype(jnp.bfloat16)
    b2d = jnp.pad(bias.reshape(1, C_out).astype(jnp.float32),
                  ((0, 0), (0, Cp - C_out)))

    out = sem_head_matmul(x_pad, w2d, b2d, tile_n=tile_n)
    return out[:N, :C_out]               # slice off row + channel padding


# --------------------------------- main ------------------------------------ #
if __name__ == "__main__":
    key = jax.random.PRNGKey(0)

    # Small, module-consistent shapes: init_size=4 -> C_in = 4*init_size = 16;
    # nclasses = 20; voxel grid (B, D, H, W) = (2, 8, 8, 8); N = 100 active voxels.
    init_size = 4
    C_in = 4 * init_size
    nclasses = 20
    B, D, H, W = 2, 8, 8, 8
    N = 100

    k_feat, k_idx, k_w, k_b = jax.random.split(key, 4)

    # Unique active voxel coordinates (no duplicates, like a SparseConvTensor).
    flat = jax.random.choice(k_idx, B * D * H * W, shape=(N,), replace=False)
    b_i = flat // (D * H * W)
    rem = flat % (D * H * W)
    z_i = rem // (H * W)
    rem = rem % (H * W)
    y_i = rem // W
    x_i = rem % W
    coords = jnp.stack([b_i, z_i, y_i, x_i], axis=1).astype(jnp.int32)   # [N, 4]

    feats = jax.random.normal(k_feat, (N, C_in), dtype=jnp.float32)       # [N, C_in]

    # Deterministic synthetic SubMConv3d parameters.
    weight = 0.05 * jax.random.normal(k_w, (3, 3, 3, C_in, nclasses), dtype=jnp.float32)
    bias = 0.1 * jax.random.normal(k_b, (nclasses,), dtype=jnp.float32)

    logits = cylinder_semantic_head(feats, coords, weight, bias, (B, D, H, W))
    logits = jax.block_until_ready(logits)

    # Reference: same im2col with the same bf16-cast operands, matmul + bias in
    # numpy f64 (kernel keeps f32 accumulation, so agreement is tight).
    feats_q = feats.astype(jnp.bfloat16).astype(jnp.float32)
    dense_r = jnp.zeros((B, D + 2, H + 2, W + 2, C_in), jnp.float32)
    dense_r = dense_r.at[coords[:, 0], coords[:, 1] + 1,
                         coords[:, 2] + 1, coords[:, 3] + 1].set(feats_q)
    cols_r = [dense_r[coords[:, 0], coords[:, 1] + dz,
                      coords[:, 2] + dy, coords[:, 3] + dx]
              for dz in range(3) for dy in range(3) for dx in range(3)]
    x_ref_mat = np.asarray(jnp.concatenate(cols_r, axis=1), dtype=np.float64)
    w_q = np.asarray(weight.reshape(27 * C_in, nclasses).astype(jnp.bfloat16)
                     .astype(jnp.float32), dtype=np.float64)
    ref = x_ref_mat @ w_q + np.asarray(bias, dtype=np.float64)

    np.testing.assert_allclose(np.asarray(logits), ref, rtol=2e-3, atol=2e-3)
    assert logits.shape == (N, nclasses)
    print("KERNEL_OK")
</pallas_src>

<mosaic_0001>
module attributes {stable_mosaic.version = 11 : i64} {
  func.func @_sem_head_kernel(%arg0: i32, %arg1: memref<128x432xbf16, #tpu.memory_space<vmem>>, %arg2: memref<432x128xbf16, #tpu.memory_space<vmem>>, %arg3: memref<1x128xf32, #tpu.memory_space<vmem>>, %arg4: memref<128x128xf32, #tpu.memory_space<vmem>>) attributes {dimension_semantics = [#tpu.dimension_semantics<parallel>], iteration_bounds = array<i64: 1>, scalar_prefetch = 0 : i64, scratch_operands = 0 : i64, tpu.core_type = #tpu.core_type<tc>, window_params = [{transform_indices = @transform_0, window_bounds = array<i64: 128, 432>}, {pipeline_mode = #tpu.pipeline_mode<synchronous>, transform_indices = @transform_1, window_bounds = array<i64: 432, 128>}, {pipeline_mode = #tpu.pipeline_mode<synchronous>, transform_indices = @transform_2, window_bounds = array<i64: 1, 128>}, {transform_indices = @transform_3, window_bounds = array<i64: 128, 128>}]} {
    %c0 = arith.constant 0 : index
    %c0_0 = arith.constant 0 : index
    %0 = vector.load %arg1[%c0, %c0_0] : memref<128x432xbf16, #tpu.memory_space<vmem>>, vector<128x432xbf16>
    %c0_1 = arith.constant 0 : index
    %c0_2 = arith.constant 0 : index
    %1 = vector.load %arg2[%c0_1, %c0_2] : memref<432x128xbf16, #tpu.memory_space<vmem>>, vector<432x128xbf16>
    %cst = arith.constant dense<0.000000e+00> : vector<128x128xf32>
    %2 = tpu.matmul %0, %1, %cst {dimension_numbers = #tpu.dot_dimension_numbers<[1], [0], [0], [1], [0, 0, 1, 1], [], []>} : vector<128x432xbf16>, vector<432x128xbf16>, vector<128x128xf32> -> vector<128x128xf32>
    %c0_3 = arith.constant 0 : index
    %c0_4 = arith.constant 0 : index
    %3 = vector.load %arg3[%c0_3, %c0_4] : memref<1x128xf32, #tpu.memory_space<vmem>>, vector<1x128xf32>
    %4 = vector.broadcast %3 : vector<1x128xf32> to vector<128x128xf32>
    %5 = arith.addf %2, %4 : vector<128x128xf32>
    %c0_5 = arith.constant 0 : index
    %c0_6 = arith.constant 0 : index
    %6 = vector.load %arg4[%c0_5, %c0_6] : memref<128x128xf32, #tpu.memory_space<vmem>>, vector<128x128xf32>
    tpu.vector_store %arg4[%c0_5, %c0_6], %5 {strides = array<i32>} : memref<128x128xf32, #tpu.memory_space<vmem>>, vector<128x128xf32>,
    return
  }
  func.func @transform_0(%arg0: i32) -> (i32, i32) {
    %c0_i32 = arith.constant 0 : i32
    %c0_i32_0 = arith.constant 0 : i32
    return %arg0, %c0_i32 : i32, i32
  }
  func.func @transform_1(%arg0: i32) -> (i32, i32) {
    %c0_i32 = arith.constant 0 : i32
    %c0_i32_0 = arith.constant 0 : i32
    %c0_i32_1 = arith.constant 0 : i32
    return %c0_i32, %c0_i32_0 : i32, i32
  }
  func.func @transform_2(%arg0: i32) -> (i32, i32) {
    %c0_i32 = arith.constant 0 : i32
    %c0_i32_0 = arith.constant 0 : i32
    %c0_i32_1 = arith.constant 0 : i32
    return %c0_i32, %c0_i32_0 : i32, i32
  }
  func.func @transform_3(%arg0: i32) -> (i32, i32) {
    %c0_i32 = arith.constant 0 : i32
    %c0_i32_0 = arith.constant 0 : i32
    return %arg0, %c0_i32 : i32, i32
  }
}

</mosaic_0001>

<llo_original>
// kernel: tpu_custom_call.1
$region0: #{tpu_custom_call.1}
  #allocation0 [shape = 'u32[]', space=smem, size = 0x4, offset = 0x4, fixed_abs, tag = 'smem constant byte address 0x4 - core index']
  #allocation1 [shape = 'u32[144,128]{1,0:T(1,128)}', space=vmem, size = 0x12000, scoped, tag = 'internal scratch']
  %s0 = inlined_call_operand.vmem [shape: bf16[128,432], index: 0, kind: input, shape index: {}]
  %s1 = inlined_call_operand.vmem [shape: bf16[432,128], index: 1, kind: input, shape index: {}]
  %s2 = inlined_call_operand.vmem [shape: f32[1,128], index: 2, kind: input, shape index: {}]
  %s3 = inlined_call_operand.hbm [shape: f32[128,128], index: 3, kind: output, shape index: {}]
  %s4 = sld [smem:[#allocation0]]
  $region22: #{tpu_custom_call.1} parent=0
    _
  %s6 = ssub.s32 1, %s4
  %s7 = scalar_select 0, %s6, %s4
  $region1: #{tpu_custom_call.1} parent=0
    #allocation2 [shape = 'u8[65536]{0}', space=vmem, size = 0x10000, scoped, tag = 'output window, operand 0, single buffered']
    #allocation3 [shape = 's32[1]{0}', space=sflag, size = 0x4, scoped, tag = 'scoped memory for tpu_custom_call.1']
    %8 = vsyncpa [#allocation3], 0
    // Predicated region
    $region2: #{tpu_custom_call.1} parent=1 // pred_check
      _
    $region3: #{tpu_custom_call.1} parent=1 // pred_check_branch
      %10 = sbr.rel (0) target = $region5
    $region4: #{tpu_custom_call.1} parent=1 // pred_region
      _
    $region5: #{tpu_custom_call.1} parent=1 // pred_fallthru
      _
    // Predicated region
    $region6: #{tpu_custom_call.1} parent=1 // pred_check
      _
    $region7: #{tpu_custom_call.1} parent=1 // pred_check_branch
      %12 = sbr.rel (0) target = $region9
    $region8: #{tpu_custom_call.1} parent=1 // pred_region
      _
    $region9: #{tpu_custom_call.1} parent=1 // pred_fallthru
      _
    // Predicated region
    $region10: #{tpu_custom_call.1} parent=1 // pred_check
      _
    $region11: #{tpu_custom_call.1} parent=1 // pred_check_branch
      %14 = sbr.rel (0) target = $region13
    $region12: #{tpu_custom_call.1} parent=1 // pred_region
      _
    $region13: #{tpu_custom_call.1} parent=1 // pred_fallthru
      _
    %v16 = vld [vmem:[%s0] sm:$0xff]
    %v17 = vld [vmem:[%s0 + $0x8] sm:$0xff]
    %v18 = vld [vmem:[%s0 + $0x10] sm:$0xff]
    %v19 = vld [vmem:[%s0 + $0x18] sm:$0xff]
    %v20 = vld [vmem:[%s0 + $0x20] sm:$0xff]
    %v21 = vld [vmem:[%s0 + $0x28] sm:$0xff]
    %v22 = vld [vmem:[%s0 + $0x30] sm:$0xff]
    %v23 = vld [vmem:[%s0 + $0x38] sm:$0xff]
    %v24 = vld [vmem:[%s0 + $0x40] sm:$0xff]
    %v25 = vld [vmem:[%s0 + $0x48] sm:$0xff]
    %v26 = vld [vmem:[%s0 + $0x50] sm:$0xff]
    %v27 = vld [vmem:[%s0 + $0x58] sm:$0xff]
    %v28 = vld [vmem:[%s0 + $0x60] sm:$0xff]
    %v29 = vld [vmem:[%s0 + $0x68] sm:$0xff]
    %v30 = vld [vmem:[%s0 + $0x70] sm:$0xff]
    %v31 = vld [vmem:[%s0 + $0x78] sm:$0xff]
    %v32 = vld [vmem:[%s0 + $0x80] sm:$0xff]
    %v33 = vld [vmem:[%s0 + $0x88] sm:$0xff]
    %v34 = vld [vmem:[%s0 + $0x90] sm:$0xff]
    %v35 = vld [vmem:[%s0 + $0x98] sm:$0xff]
    %v36 = vld [vmem:[%s0 + $0xa0] sm:$0xff]
    %v37 = vld [vmem:[%s0 + $0xa8] sm:$0xff]
    %v38 = vld [vmem:[%s0 + $0xb0] sm:$0xff]
    %v39 = vld [vmem:[%s0 + $0xb8] sm:$0xff]
    %v40 = vld [vmem:[%s0 + $0xc0] sm:$0xff]
    %v41 = vld [vmem:[%s0 + $0xc8] sm:$0xff]
    %v42 = vld [vmem:[%s0 + $0xd0] sm:$0xff]
    %v43 = vld [vmem:[%s0 + $0xd8] sm:$0xff]
    %v44 = vld [vmem:[%s0 + $0xe0] sm:$0xff]
    %v45 = vld [vmem:[%s0 + $0xe8] sm:$0xff]
    %v46 = vld [vmem:[%s0 + $0xf0] sm:$0xff]
    %v47 = vld [vmem:[%s0 + $0xf8] sm:$0xff]
    %v48 = vld [vmem:[%s1] sm:$0xf]
    %v49 = vld [vmem:[%s1 + $0x4] sm:$0xf]
    %v50 = vld [vmem:[%s1 + $0x8] sm:$0xf]
    %v51 = vld [vmem:[%s1 + $0xc] sm:$0xf]
    %v52 = vld [vmem:[%s1 + $0x10] sm:$0xf]
    %v53 = vld [vmem:[%s1 + $0x14] sm:$0xf]
    %v54 = vld [vmem:[%s1 + $0x18] sm:$0xf]
    %v55 = vld [vmem:[%s1 + $0x1c] sm:$0xf]
    %v56 = vld [vmem:[%s1 + $0x20] sm:$0xf]
    %v57 = vld [vmem:[%s1 + $0x24] sm:$0xf]
    %v58 = vld [vmem:[%s1 + $0x28] sm:$0xf]
    %v59 = vld [vmem:[%s1 + $0x2c] sm:$0xf]
    %v60 = vld [vmem:[%s1 + $0x30] sm:$0xf]
    %v61 = vld [vmem:[%s1 + $0x34] sm:$0xf]
    %v62 = vld [vmem:[%s1 + $0x38] sm:$0xf]
    %v63 = vld [vmem:[%s1 + $0x3c] sm:$0xf]
    %v64 = vld [vmem:[%s1 + $0x40] sm:$0xf]
    %v65 = vld [vmem:[%s1 + $0x44] sm:$0xf]
    %v66 = vld [vmem:[%s1 + $0x48] sm:$0xf]
    %v67 = vld [vmem:[%s1 + $0x4c] sm:$0xf]
    %v68 = vld [vmem:[%s1 + $0x50] sm:$0xf]
    %v69 = vld [vmem:[%s1 + $0x54] sm:$0xf]
    %v70 = vld [vmem:[%s1 + $0x58] sm:$0xf]
    %v71 = vld [vmem:[%s1 + $0x5c] sm:$0xf]
    %v72 = vld [vmem:[%s1 + $0x60] sm:$0xf]
    %v73 = vld [vmem:[%s1 + $0x64] sm:$0xf]
    %v74 = vld [vmem:[%s1 + $0x68] sm:$0xf]
    %v75 = vld [vmem:[%s1 + $0x6c] sm:$0xf]
    %v76 = vld [vmem:[%s1 + $0x70] sm:$0xf]
    %v77 = vld [vmem:[%s1 + $0x74] sm:$0xf]
    %v78 = vld [vmem:[%s1 + $0x78] sm:$0xf]
    %v79 = vld [vmem:[%s1 + $0x7c] sm:$0xf]
    %v80 = vld [vmem:[%s1 + $0x80] sm:$0xf]
    %v81 = vld [vmem:[%s1 + $0x84] sm:$0xf]
    %v82 = vld [vmem:[%s1 + $0x88] sm:$0xf]
    %v83 = vld [vmem:[%s1 + $0x8c] sm:$0xf]
    %v84 = vld [vmem:[%s1 + $0x90] sm:$0xf]
    %v85 = vld [vmem:[%s1 + $0x94] sm:$0xf]
    %v86 = vld [vmem:[%s1 + $0x98] sm:$0xf]
    %v87 = vld [vmem:[%s1 + $0x9c] sm:$0xf]
    %v88 = vld [vmem:[%s1 + $0xa0] sm:$0xf]
    %v89 = vld [vmem:[%s1 + $0xa4] sm:$0xf]
    %v90 = vld [vmem:[%s1 + $0xa8] sm:$0xf]
    %v91 = vld [vmem:[%s1 + $0xac] sm:$0xf]
    %v92 = vld [vmem:[%s1 + $0xb0] sm:$0xf]
    %v93 = vld [vmem:[%s1 + $0xb4] sm:$0xf]
    %v94 = vld [vmem:[%s1 + $0xb8] sm:$0xf]
    %v95 = vld [vmem:[%s1 + $0xbc] sm:$0xf]
    %v96 = vld [vmem:[%s1 + $0xc0] sm:$0xf]
    %v97 = vld [vmem:[%s1 + $0xc4] sm:$0xf]
    %v98 = vld [vmem:[%s1 + $0xc8] sm:$0xf]
    %v99 = vld [vmem:[%s1 + $0xcc] sm:$0xf]
    %v100 = vld [vmem:[%s1 + $0xd0] sm:$0xf]
    %v101 = vld [vmem:[%s1 + $0xd4] sm:$0xf]
    %v102 = vld [vmem:[%s2] sm:$0x1]
    %v104 = vlaneseq
    %v105 = vshrl.u32 %v104, 7
    %v106 = vsub.s32 0, %v105
    %v107 = vrot.slane %v102, %v106
    %v141 = vunpack.c.l.b16 %v16
    %v142 = vunpack.c.h.b16 %v16
    %v143 = vunpack.c.l.b16 %v17
    %v144 = vunpack.c.h.b16 %v17
    %v145 = vunpack.c.l.b16 %v18
    %v146 = vunpack.c.h.b16 %v18
    %v147 = vunpack.c.l.b16 %v19
    %v148 = vunpack.c.h.b16 %v19
    %v149 = vunpack.c.l.b16 %v20
    %v150 = vunpack.c.h.b16 %v20
    %v151 = vunpack.c.l.b16 %v21
    %v152 = vunpack.c.h.b16 %v21
    %v153 = vunpack.c.l.b16 %v22
    %v154 = vunpack.c.h.b16 %v22
    %v155 = vunpack.c.l.b16 %v23
    %v156 = vunpack.c.h.b16 %v23
    %v157 = vunpack.c.l.b16 %v24
    %v158 = vunpack.c.h.b16 %v24
    %v159 = vunpack.c.l.b16 %v25
    %v160 = vunpack.c.h.b16 %v25
    %v161 = vunpack.c.l.b16 %v26
    %v162 = vunpack.c.h.b16 %v26
    %v163 = vunpack.c.l.b16 %v27
    %v164 = vunpack.c.h.b16 %v27
    %v165 = vunpack.c.l.b16 %v28
    %v166 = vunpack.c.h.b16 %v28
    %v167 = vunpack.c.l.b16 %v29
    %v168 = vunpack.c.h.b16 %v29
    %v169 = vunpack.c.l.b16 %v30
    %v170 = vunpack.c.h.b16 %v30
    %v171 = vunpack.c.l.b16 %v31
    %v172 = vunpack.c.h.b16 %v31
    %v173 = vunpack.c.l.b16 %v32
    %v174 = vunpack.c.h.b16 %v32
    %v175 = vunpack.c.l.b16 %v33
    %v176 = vunpack.c.h.b16 %v33
    %v177 = vunpack.c.l.b16 %v34
    %v178 = vunpack.c.h.b16 %v34
    %v179 = vunpack.c.l.b16 %v35
    %v180 = vunpack.c.h.b16 %v35
    %v181 = vunpack.c.l.b16 %v36
    %v182 = vunpack.c.h.b16 %v36
    %v183 = vunpack.c.l.b16 %v37
    %v184 = vunpack.c.h.b16 %v37
    %v185 = vunpack.c.l.b16 %v38
    %v186 = vunpack.c.h.b16 %v38
    %v187 = vunpack.c.l.b16 %v39
    %v188 = vunpack.c.h.b16 %v39
    %v189 = vunpack.c.l.b16 %v40
    %v190 = vunpack.c.h.b16 %v40
    %v191 = vunpack.c.l.b16 %v41
    %v192 = vunpack.c.h.b16 %v41
    %v193 = vunpack.c.l.b16 %v42
    %v194 = vunpack.c.h.b16 %v42
    %v195 = vunpack.c.l.b16 %v43
    %v196 = vunpack.c.h.b16 %v43
    %v197 = vunpack.c.l.b16 %v44
    %v198 = vunpack.c.h.b16 %v44
    %v199 = vunpack.c.l.b16 %v45
    %v200 = vunpack.c.h.b16 %v45
    %v201 = vunpack.c.l.b16 %v46
    %v202 = vunpack.c.h.b16 %v46
    %v203 = vunpack.c.l.b16 %v47
    %v204 = vunpack.c.h.b16 %v47
    %v205 = vpack.c.b16 %v145, %v141
    %v206 = vpack.c.b16 %v146, %v142
    %v207 = vpack.c.b16 %v147, %v143
    %v208 = vpack.c.b16 %v148, %v144
    %v209 = vpack.c.b16 %v153, %v149
    %v210 = vpack.c.b16 %v154, %v150
    %v211 = vpack.c.b16 %v155, %v151
    %v212 = vpack.c.b16 %v156, %v152
    %v213 = vpack.c.b16 %v161, %v157
    %v214 = vpack.c.b16 %v162, %v158
    %v215 = vpack.c.b16 %v163, %v159
    %v216 = vpack.c.b16 %v164, %v160
    %v217 = vpack.c.b16 %v169, %v165
    %v218 = vpack.c.b16 %v170, %v166
    %v219 = vpack.c.b16 %v171, %v167
    %v220 = vpack.c.b16 %v172, %v168
    %v221 = vpack.c.b16 %v177, %v173
    %v222 = vpack.c.b16 %v178, %v174
    %v223 = vpack.c.b16 %v179, %v175
    %v224 = vpack.c.b16 %v180, %v176
    %v225 = vpack.c.b16 %v185, %v181
    %v226 = vpack.c.b16 %v186, %v182
    %v227 = vpack.c.b16 %v187, %v183
    %v228 = vpack.c.b16 %v188, %v184
    %v229 = vpack.c.b16 %v193, %v189
    %v230 = vpack.c.b16 %v194, %v190
    %v231 = vpack.c.b16 %v195, %v191
    %v232 = vpack.c.b16 %v196, %v192
    %v233 = vpack.c.b16 %v201, %v197
    %v234 = vpack.c.b16 %v202, %v198
    %v235 = vpack.c.b16 %v203, %v199
    %v236 = vpack.c.b16 %v204, %v200
    %v315 = vunpack.c.l.b16 %v48
    %v316 = vunpack.c.l.b16 %v49
    %v317 = vunpack.c.l.b16 %v50
    %v318 = vunpack.c.l.b16 %v51
    %v319 = vunpack.c.l.b16 %v52
    %v320 = vunpack.c.l.b16 %v53
    %v321 = vunpack.c.l.b16 %v54
    %v322 = vunpack.c.l.b16 %v55
    %v323 = vunpack.c.l.b16 %v56
    %v324 = vunpack.c.l.b16 %v57
    %v325 = vunpack.c.l.b16 %v58
    %v326 = vunpack.c.l.b16 %v59
    %v327 = vunpack.c.l.b16 %v60
    %v328 = vunpack.c.l.b16 %v61
    %v329 = vunpack.c.l.b16 %v62
    %v330 = vunpack.c.l.b16 %v63
    %v331 = vunpack.c.l.b16 %v64
    %v332 = vunpack.c.l.b16 %v65
    %v333 = vunpack.c.l.b16 %v66
    %v334 = vunpack.c.l.b16 %v67
    %v335 = vunpack.c.l.b16 %v68
    %v336 = vunpack.c.l.b16 %v69
    %v337 = vunpack.c.l.b16 %v70
    %v338 = vunpack.c.l.b16 %v71
    %v339 = vunpack.c.l.b16 %v72
    %v340 = vunpack.c.l.b16 %v73
    %v341 = vunpack.c.l.b16 %v74
    %v342 = vunpack.c.l.b16 %v75
    %v343 = vunpack.c.l.b16 %v76
    %v344 = vunpack.c.l.b16 %v77
    %v345 = vunpack.c.l.b16 %v78
    %v346 = vunpack.c.l.b16 %v79
    %v347 = vunpack.c.l.b16 %v80
    %v348 = vunpack.c.l.b16 %v81
    %v349 = vunpack.c.l.b16 %v82
    %v350 = vunpack.c.l.b16 %v83
    %v351 = vunpack.c.l.b16 %v84
    %v352 = vunpack.c.l.b16 %v85
    %v353 = vunpack.c.l.b16 %v86
    %v354 = vunpack.c.l.b16 %v87
    %v355 = vunpack.c.l.b16 %v88
    %v356 = vunpack.c.l.b16 %v89
    %v357 = vunpack.c.l.b16 %v90
    %v358 = vunpack.c.l.b16 %v91
    %v359 = vunpack.c.l.b16 %v92
    %v360 = vunpack.c.l.b16 %v93
    %v361 = vunpack.c.l.b16 %v94
    %v362 = vunpack.c.l.b16 %v95
    %v363 = vunpack.c.l.b16 %v96
    %v364 = vunpack.c.l.b16 %v97
    %v365 = vunpack.c.l.b16 %v98
    %v366 = vunpack.c.l.b16 %v99
    %v367 = vunpack.c.l.b16 %v100
    %v368 = vunpack.c.l.b16 %v101
    %v369 = vpack.c.b16 %v316, %v315
    %v370 = vpack.c.b16 %v318, %v317
    %v371 = vpack.c.b16 %v320, %v319
    %v372 = vpack.c.b16 %v322, %v321
    %v373 = vpack.c.b16 %v324, %v323
    %v374 = vpack.c.b16 %v326, %v325
    %v375 = vpack.c.b16 %v328, %v327
    %v376 = vpack.c.b16 %v330, %v329
    %v377 = vpack.c.b16 %v332, %v331
    %v378 = vpack.c.b16 %v334, %v333
    %v379 = vpack.c.b16 %v336, %v335
    %v380 = vpack.c.b16 %v338, %v337
    %v381 = vpack.c.b16 %v340, %v339
    %v382 = vpack.c.b16 %v342, %v341
    %v383 = vpack.c.b16 %v344, %v343
    %v384 = vpack.c.b16 %v346, %v345
    %v385 = vpack.c.b16 %v348, %v347
    %v386 = vpack.c.b16 %v350, %v349
    %v387 = vpack.c.b16 %v352, %v351
    %v388 = vpack.c.b16 %v354, %v353
    %v389 = vpack.c.b16 %v356, %v355
    %v390 = vpack.c.b16 %v358, %v357
    %v391 = vpack.c.b16 %v360, %v359
    %v392 = vpack.c.b16 %v362, %v361
    %v393 = vpack.c.b16 %v364, %v363
    %v394 = vpack.c.b16 %v366, %v365
    %v395 = vpack.c.b16 %v368, %v367
    %vm423 = vcmask 392192
    %v425 = vsel %vm423, %v208, 0
    %v428 = vsel %vm423, %v212, 0
    %v431 = vsel %vm423, %v216, 0
    %v434 = vsel %vm423, %v220, 0
    %v437 = vsel %vm423, %v224, 0
    %v440 = vsel %vm423, %v228, 0
    %v443 = vsel %vm423, %v232, 0
    %v446 = vsel %vm423, %v236, 0
    %448 = vmatprep.subr.bf16.mxu0 0
    %449 = vmatpush1.bf16.msra.mxu0 %v369
    %450 = vmatprep.subr.bf16.mxu0 0
    %451 = vmatpush1.bf16.msra.mxu0 %v370
    %452 = vmatprep.subr.bf16.mxu0 0
    %453 = vmatpush1.bf16.msra.mxu0 %v371
    %454 = vmatprep.subr.bf16.mxu0 0
    %455 = vmatpush1.bf16.msra.mxu0 %v372
    %456 = vmatprep.subr.bf16.mxu0 0
    %457 = vmatpush1.bf16.msra.mxu0 %v373
    %458 = vmatprep.subr.bf16.mxu0 0
    %459 = vmatpush1.bf16.msra.mxu0 %v374
    %460 = vmatprep.subr.bf16.mxu0 0
    %461 = vmatpush1.bf16.msra.mxu0 %v375
    %462 = vmatprep.subr.bf16.mxu0 0
    %463 = vmatpush1.bf16.msra.mxu0 %v376
    %464 = vmatprep.subr.bf16.mxu0 0
    %465 = vmatpush1.bf16.msra.mxu0 %v377
    %466 = vmatprep.subr.bf16.mxu0 0
    %467 = vmatpush1.bf16.msra.mxu0 %v378
    %468 = vmatprep.subr.bf16.mxu0 0
    %469 = vmatpush1.bf16.msra.mxu0 %v379
    %470 = vmatprep.subr.bf16.mxu0 0
    %471 = vmatpush1.bf16.msra.mxu0 %v380
    %472 = vmatprep.subr.bf16.mxu0 0
    %473 = vmatpush1.bf16.msra.mxu0 %v381
    %474 = vmatprep.subr.bf16.mxu0 0
    %475 = vmatpush1.bf16.msra.mxu0 %v382
    %476 = vmatprep.subr.bf16.mxu0 0
    %477 = vmatpush1.bf16.msra.mxu0 %v383
    %478 = vmatprep.subr.bf16.mxu0 0
    %479 = vmatpush1.bf16.msra.mxu0 %v384
    %480 = vmatprep.mubr.bf16.mxu0 %v206
    %481 = vmatmul.mubr.bf16.gmra.mrb[0].mxu0 %v205
    %v482 = vpop.f32.mrb[0].mxu0
    %v483 = vadd.f32 %v107, %v482
    %v484 = vpop.f32.mrb[0].mxu0
    %v485 = vpop.f32.mrb[0].mxu0
    %v486 = vadd.f32 %v107, %v485
    %v487 = vpop.f32.mrb[0].mxu0
    %488 = vmatprep.mubr.bf16.mxu0 %v210
    %489 = vmatmul.mubr.bf16.gmra.mrb[0].mxu0 %v209
    %v490 = vpop.f32.mrb[0].mxu0
    %v491 = vadd.f32 %v107, %v490
    %v492 = vpop.f32.mrb[0].mxu0
    %v493 = vpop.f32.mrb[0].mxu0
    %v494 = vadd.f32 %v107, %v493
    %v495 = vpop.f32.mrb[0].mxu0
    %496 = vmatprep.mubr.bf16.mxu0 %v214
    %497 = vmatmul.mubr.bf16.gmra.mrb[0].mxu0 %v213
    %v498 = vpop.f32.mrb[0].mxu0
    %v499 = vadd.f32 %v107, %v498
    %v500 = vpop.f32.mrb[0].mxu0
    %v501 = vpop.f32.mrb[0].mxu0
    %v502 = vadd.f32 %v107, %v501
    %v503 = vpop.f32.mrb[0].mxu0
    %504 = vmatprep.mubr.bf16.mxu0 %v218
    %505 = vmatmul.mubr.bf16.gmra.mrb[0].mxu0 %v217
    %v506 = vpop.f32.mrb[0].mxu0
    %v507 = vadd.f32 %v107, %v506
    %v508 = vpop.f32.mrb[0].mxu0
    %v509 = vpop.f32.mrb[0].mxu0
    %v510 = vadd.f32 %v107, %v509
    %v511 = vpop.f32.mrb[0].mxu0
    %512 = vmatprep.mubr.bf16.mxu0 %v222
    %513 = vmatmul.mubr.bf16.gmra.mrb[0].mxu0 %v221
    %v514 = vpop.f32.mrb[0].mxu0
    %v515 = vadd.f32 %v107, %v514
    %v516 = vpop.f32.mrb[0].mxu0
    %v517 = vpop.f32.mrb[0].mxu0
    %v518 = vadd.f32 %v107, %v517
    %v519 = vpop.f32.mrb[0].mxu0
    %520 = vmatprep.mubr.bf16.mxu0 %v226
    %521 = vmatmul.mubr.bf16.gmra.mrb[0].mxu0 %v225
    %v522 = vpop.f32.mrb[0].mxu0
    %v523 = vadd.f32 %v107, %v522
    %v524 = vpop.f32.mrb[0].mxu0
    %v525 = vpop.f32.mrb[0].mxu0
    %v526 = vadd.f32 %v107, %v525
    %v527 = vpop.f32.mrb[0].mxu0
    %528 = vmatprep.mubr.bf16.mxu0 %v230
    %529 = vmatmul.mubr.bf16.gmra.mrb[0].mxu0 %v229
    %v530 = vpop.f32.mrb[0].mxu0
    %v531 = vadd.f32 %v107, %v530
    %v532 = vpop.f32.mrb[0].mxu0
    %v533 = vpop.f32.mrb[0].mxu0
    %v534 = vadd.f32 %v107, %v533
    %v535 = vpop.f32.mrb[0].mxu0
    %536 = vmatprep.mubr.bf16.mxu0 %v234
    %537 = vmatmul.mubr.bf16.gmra.mrb[0].mxu0 %v233
    %v538 = vpop.f32.mrb[0].mxu0
    %v539 = vadd.f32 %v107, %v538
    %v540 = vpop.f32.mrb[0].mxu0
    %v541 = vpop.f32.mrb[0].mxu0
    %v542 = vadd.f32 %v107, %v541
    %v543 = vpop.f32.mrb[0].mxu0
    %544 = vdwg.mxu0
    %545 = vmatprep.subr.bf16.mxu0 0
    %546 = vmatpush1.bf16.msra.mxu0 %v385
    %547 = vmatprep.subr.bf16.mxu0 0
    %548 = vmatpush1.bf16.msra.mxu0 %v386
    %549 = vmatprep.subr.bf16.mxu0 0
    %550 = vmatpush1.bf16.msra.mxu0 %v387
    %551 = vmatprep.subr.bf16.mxu0 0
    %552 = vmatpush1.bf16.msra.mxu0 %v388
    %553 = vmatprep.subr.bf16.mxu0 0
    %554 = vmatpush1.bf16.msra.mxu0 %v389
    %555 = vmatprep.subr.bf16.mxu0 0
    %556 = vmatpush1.bf16.msra.mxu0 %v390
    %557 = vmatprep.subr.bf16.mxu0 0
    %558 = vmatpush1.bf16.msra.mxu0 %v391
    %559 = vmatprep.subr.bf16.mxu0 0
    %560 = vmatpush1.bf16.msra.mxu0 %v392
    %561 = vmatprep.subr.bf16.mxu0 0
    %562 = vmatpush1.bf16.msra.mxu0 %v393
    %563 = vmatprep.subr.bf16.mxu0 0
    %564 = vmatpush1.bf16.msra.mxu0 %v394
    %565 = vmatprep.subr.bf16.mxu0 0
    %566 = vmatpush1.bf16.msra.mxu0 %v395
    %567 = vmatprep.subr.bf16.mxu0 0
    %568 = vmatpush1.bf16.msra.mxu0 0
    %569 = vmatprep.subr.bf16.mxu0 0
    %570 = vmatpush1.bf16.msra.mxu0 0
    %571 = vmatprep.subr.bf16.mxu0 0
    %572 = vmatpush1.bf16.msra.mxu0 0
    %573 = vmatprep.subr.bf16.mxu0 0
    %574 = vmatpush1.bf16.msra.mxu0 0
    %575 = vmatprep.subr.bf16.mxu0 0
    %576 = vmatpush1.bf16.msra.mxu0 0
    %577 = vmatprep.mubr.bf16.mxu0 %v425
    %578 = vmatmul.mubr.bf16.gmra.mrb[0].mxu0 %v207
    %v579 = vpop.f32.mrb[0].mxu0
    %v580 = vadd.f32 %v483, %v579
    %v581 = vpop.f32.mrb[0].mxu0
    %v582 = vpop.f32.mrb[0].mxu0
    %v583 = vadd.f32 %v486, %v582
    %v584 = vpop.f32.mrb[0].mxu0
    %585 = vmatprep.mubr.bf16.mxu0 %v428
    %586 = vmatmul.mubr.bf16.gmra.mrb[0].mxu0 %v211
    %v587 = vpop.f32.mrb[0].mxu0
    %v588 = vadd.f32 %v491, %v587
    %v589 = vpop.f32.mrb[0].mxu0
    %v590 = vpop.f32.mrb[0].mxu0
    %v591 = vadd.f32 %v494, %v590
    %v592 = vpop.f32.mrb[0].mxu0
    %593 = vmatprep.mubr.bf16.mxu0 %v431
    %594 = vmatmul.mubr.bf16.gmra.mrb[0].mxu0 %v215
    %v595 = vpop.f32.mrb[0].mxu0
    %v596 = vadd.f32 %v499, %v595
    %v597 = vpop.f32.mrb[0].mxu0
    %v598 = vpop.f32.mrb[0].mxu0
    %v599 = vadd.f32 %v502, %v598
    %v600 = vpop.f32.mrb[0].mxu0
    %601 = vmatprep.mubr.bf16.mxu0 %v434
    %602 = vmatmul.mubr.bf16.gmra.mrb[0].mxu0 %v219
    %v603 = vpop.f32.mrb[0].mxu0
    %v604 = vadd.f32 %v507, %v603
    %v605 = vpop.f32.mrb[0].mxu0
    %v606 = vpop.f32.mrb[0].mxu0
    %v607 = vadd.f32 %v510, %v606
    %v608 = vpop.f32.mrb[0].mxu0
    %609 = vmatprep.mubr.bf16.mxu0 %v437
    %610 = vmatmul.mubr.bf16.gmra.mrb[0].mxu0 %v223
    %v611 = vpop.f32.mrb[0].mxu0
    %v612 = vadd.f32 %v515, %v611
    %v613 = vpop.f32.mrb[0].mxu0
    %v614 = vpop.f32.mrb[0].mxu0
    %v615 = vadd.f32 %v518, %v614
    %v616 = vpop.f32.mrb[0].mxu0
    %617 = vmatprep.mubr.bf16.mxu0 %v440
    %618 = vmatmul.mubr.bf16.gmra.mrb[0].mxu0 %v227
    %v619 = vpop.f32.mrb[0].mxu0
    %v620 = vadd.f32 %v523, %v619
    %v621 = vpop.f32.mrb[0].mxu0
    %v622 = vpop.f32.mrb[0].mxu0
    %v623 = vadd.f32 %v526, %v622
    %v624 = vpop.f32.mrb[0].mxu0
    %625 = vmatprep.mubr.bf16.mxu0 %v443
    %626 = vmatmul.mubr.bf16.gmra.mrb[0].mxu0 %v231
    %v627 = vpop.f32.mrb[0].mxu0
    %v628 = vadd.f32 %v531, %v627
    %v629 = vpop.f32.mrb[0].mxu0
    %v630 = vpop.f32.mrb[0].mxu0
    %v631 = vadd.f32 %v534, %v630
    %v632 = vpop.f32.mrb[0].mxu0
    %633 = vmatprep.mubr.bf16.mxu0 %v446
    %634 = vmatmul.mubr.bf16.gmra.mrb[0].mxu0 %v235
    %v635 = vpop.f32.mrb[0].mxu0
    %v636 = vadd.f32 %v539, %v635
    %v637 = vpop.f32.mrb[0].mxu0
    %v638 = vpop.f32.mrb[0].mxu0
    %v639 = vadd.f32 %v542, %v638
    %v640 = vpop.f32.mrb[0].mxu0
    %641 = vdwg.mxu0
    %642 = vst [vmem:[#allocation2] sm:$0xff] %v580
    %643 = vst [vmem:[#allocation2 + $0x8] sm:$0xff] %v583
    %644 = vst [vmem:[#allocation2 + $0x10] sm:$0xff] %v588
    %645 = vst [vmem:[#allocation2 + $0x18] sm:$0xff] %v591
    %646 = vst [vmem:[#allocation2 + $0x20] sm:$0xff] %v596
    %647 = vst [vmem:[#allocation2 + $0x28] sm:$0xff] %v599
    %648 = vst [vmem:[#allocation2 + $0x30] sm:$0xff] %v604
    %649 = vst [vmem:[#allocation2 + $0x38] sm:$0xff] %v607
    %650 = vst [vmem:[#allocation2 + $0x40] sm:$0xff] %v612
    %651 = vst [vmem:[#allocation2 + $0x48] sm:$0xff] %v615
    %652 = vst [vmem:[#allocation2 + $0x50] sm:$0xff] %v620
    %653 = vst [vmem:[#allocation2 + $0x58] sm:$0xff] %v623
    %654 = vst [vmem:[#allocation2 + $0x60] sm:$0xff] %v628
    %655 = vst [vmem:[#allocation2 + $0x68] sm:$0xff] %v631
    %656 = vst [vmem:[#allocation2 + $0x70] sm:$0xff] %v636
    %657 = vst [vmem:[#allocation2 + $0x78] sm:$0xff] %v639
    // Predicated region
    $region14: #{tpu_custom_call.1} parent=1 // pred_check
      _
    $region15: #{tpu_custom_call.1} parent=1 // pred_check_branch
      %659 = sbr.rel (0) target = $region17
    $region16: #{tpu_custom_call.1} parent=1 // pred_region
      %s661 = ssub.s32 2048, 2048
      %662 = vsyncadd [#allocation3], %s661
      %s663 = sshll.u32 [#allocation2], 4
      %s664 = int_to_ptr.vmem [resolvable:$true] %s663
      %669 = dma.vmem_to_hbm [thread:$0]  %s664, 2048, %s3, [#allocation3], 128, 128, 8
    $region17: #{tpu_custom_call.1} parent=1 // pred_fallthru
      _
    // Predicated region
    $region18: #{tpu_custom_call.1} parent=1 // pred_check
      _
    $region19: #{tpu_custom_call.1} parent=1 // pred_check_branch
      %671 = sbr.rel (0) target = $region21
    $region20: #{tpu_custom_call.1} parent=1 // pred_region
      %672 = dma.done [#allocation3], 2048
    $region21: #{tpu_custom_call.1} parent=1 // pred_fallthru
      _
    %673 = vsyncpa [#allocation3], 1

</llo_original>
